<compile_context>
chip_gen: v6e
topology: v6e:2x2x1
jax: 0.10.0
libtpu: 0.0.40
codegen_flags: <defaults>
</compile_context>

<pallas_src>
import math

import jax
import jax.numpy as jnp
from jax.experimental import pallas as pl
from jax.experimental.pallas import tpu as pltpu


def _gelu_tanh(x):
    # PyTorch nn.GELU(approximate='tanh'):
    # 0.5 * x * (1 + tanh(sqrt(2/pi) * (x + 0.044715 * x^3)))
    c = math.sqrt(2.0 / math.pi)
    return 0.5 * x * (1.0 + jnp.tanh(c * (x + 0.044715 * x * x * x)))


def mlp_kernel(x_ref, wfc_ref, bfc_ref, wproj_ref, bproj_ref, o_ref, acc_ref):
    # Grid: (row tiles "parallel", H chunks "arbitrary"/reduction).
    # x_ref:    (tm, C)       native dtype (e.g. bf16)
    # wfc_ref:  (C, tH)       chunk of W_fc
    # bfc_ref:  (1, tH)       chunk of b_fc
    # wproj_ref:(tH, C)       chunk of W_proj
    # bproj_ref:(1, C)
    # o_ref:    (tm, C)       written on the last H chunk
    # acc_ref:  (tm, C) f32   accumulator scratch (resident across H chunks)
    k = pl.program_id(1)

    @pl.when(k == 0)
    def _():
        acc_ref[...] = jnp.zeros_like(acc_ref)

    # c_fc partial: (tm, C) @ (C, tH) on the MXU with f32 accumulation.
    h = jnp.dot(x_ref[...], wfc_ref[...], preferred_element_type=jnp.float32)
    h = h + bfc_ref[...].astype(jnp.float32)

    # GELU (tanh approx) in f32 on VPU/EUP.
    h = _gelu_tanh(h)

    # c_proj partial: (tm, tH) @ (tH, C), accumulated into the f32 scratch.
    acc_ref[...] += jnp.dot(h.astype(wproj_ref.dtype), wproj_ref[...],
                            preferred_element_type=jnp.float32)

    @pl.when(k == pl.num_programs(1) - 1)
    def _():
        o_ref[...] = (acc_ref[...]
                      + bproj_ref[...].astype(jnp.float32)).astype(o_ref.dtype)


def _round_up(x, m):
    return ((x + m - 1) // m) * m


def _pick_th(H, target=512):
    """Largest H-chunk <= target that divides H (multiple of 128 when possible)."""
    if H <= target:
        return H
    th = target - (target % 128) if target % 128 else target
    while th > 128 and H % th:
        th -= 128
    if th <= 0 or H % th:
        return H  # fallback: fully resident
    return th


def mlp_pallas(x, w_fc, b_fc, w_proj, b_proj, *, tm=256, th=512):
    """x: (B, T, C). w_fc: (C, H), b_fc: (H,), w_proj: (H, C), b_proj: (C,).

    Weights are stored as (in_features, out_features), i.e. the transpose of
    PyTorch's nn.Linear weight, so the kernel computes x @ W + b.
    """
    B, T, C = x.shape
    H = w_fc.shape[1]
    M = B * T

    # Row tile: MXU-aligned, clamped to the (8-padded) problem size.
    tm = max(8, min(_round_up(tm, 8), _round_up(M, 8)))
    grid_m = pl.cdiv(M, tm)
    M_pad = grid_m * tm

    # Hidden-dim chunk (reduction axis of the grid).
    th = _pick_th(H, target=th)
    grid_h = H // th

    x2d = x.reshape(M, C)
    if M_pad != M:
        x2d = jnp.pad(x2d, ((0, M_pad - M), (0, 0)))
    b_fc2 = b_fc.reshape(1, H)
    b_proj2 = b_proj.reshape(1, C)

    out2d = pl.pallas_call(
        mlp_kernel,
        out_shape=jax.ShapeDtypeStruct((M_pad, C), x.dtype),
        grid_spec=pltpu.PrefetchScalarGridSpec(
            num_scalar_prefetch=0,
            grid=(grid_m, grid_h),
            in_specs=[
                pl.BlockSpec((tm, C), lambda i, k: (i, 0)),   # x tile (row block)
                pl.BlockSpec((C, th), lambda i, k: (0, k)),   # W_fc H-chunk
                pl.BlockSpec((1, th), lambda i, k: (0, k)),   # b_fc H-chunk
                pl.BlockSpec((th, C), lambda i, k: (k, 0)),   # W_proj H-chunk
                pl.BlockSpec((1, C), lambda i, k: (0, 0)),    # b_proj
            ],
            out_specs=pl.BlockSpec((tm, C), lambda i, k: (i, 0)),
            scratch_shapes=[pltpu.VMEM((tm, C), jnp.float32)],
        ),
        compiler_params=pltpu.CompilerParams(
            dimension_semantics=("parallel", "arbitrary"),
            vmem_limit_bytes=48 * 1024 * 1024,
        ),
    )(x2d, w_fc, b_fc2, w_proj, b_proj2)

    return out2d[:M].reshape(B, T, C)


def mlp_reference(x, w_fc, b_fc, w_proj, b_proj):
    """Pure-JAX reference mirroring the kernel's numerics (native-dtype matmuls
    with f32 accumulation, f32 GELU)."""
    C = x.shape[-1]
    x2 = x.reshape(-1, C)
    h = jnp.dot(x2, w_fc, preferred_element_type=jnp.float32)
    h = h + b_fc.astype(jnp.float32)
    h = _gelu_tanh(h)
    out = jnp.dot(h.astype(w_proj.dtype), w_proj,
                  preferred_element_type=jnp.float32)
    out = out + b_proj.astype(jnp.float32)
    return out.astype(x.dtype).reshape(x.shape)


if __name__ == "__main__":
    # Small synthetic config: n_embd = 32 -> hidden = 128.
    B, T, C = 2, 8, 32
    H = 4 * C

    key = jax.random.PRNGKey(0)
    kx, k1, k2, k3, k4 = jax.random.split(key, 5)

    # bf16 activations/weights exercise the fast MXU path; accumulation is f32.
    dtype = jnp.bfloat16
    x = jax.random.normal(kx, (B, T, C), dtype=jnp.float32).astype(dtype)

    # nn.Linear default init: U(-1/sqrt(fan_in), 1/sqrt(fan_in)).
    bound_fc = 1.0 / math.sqrt(C)
    bound_proj = 1.0 / math.sqrt(H)
    # Stored as (in, out) == transpose of PyTorch's (out, in) weight.
    w_fc = jax.random.uniform(k1, (C, H), jnp.float32, -bound_fc, bound_fc).astype(dtype)
    b_fc = jax.random.uniform(k2, (H,), jnp.float32, -bound_fc, bound_fc).astype(dtype)
    w_proj = jax.random.uniform(k3, (H, C), jnp.float32, -bound_proj, bound_proj).astype(dtype)
    b_proj = jax.random.uniform(k4, (C,), jnp.float32, -bound_proj, bound_proj).astype(dtype)

    out = mlp_pallas(x, w_fc, b_fc, w_proj, b_proj)
    out = jax.block_until_ready(out)

    ref = mlp_reference(x, w_fc, b_fc, w_proj, b_proj)
    assert out.shape == (B, T, C)
    assert jnp.allclose(out.astype(jnp.float32), ref.astype(jnp.float32),
                        atol=2e-2, rtol=2e-2), "mismatch vs reference"

    print("KERNEL_OK")
</pallas_src>

<mosaic_0001>
module attributes {stable_mosaic.version = 11 : i64} {
  func.func @mlp_kernel(%arg0: i32, %arg1: i32, %arg2: memref<16x32xbf16, #tpu.memory_space<vmem>>, %arg3: memref<32x128xbf16, #tpu.memory_space<vmem>>, %arg4: memref<1x128xbf16, #tpu.memory_space<vmem>>, %arg5: memref<128x32xbf16, #tpu.memory_space<vmem>>, %arg6: memref<1x32xbf16, #tpu.memory_space<vmem>>, %arg7: memref<16x32xbf16, #tpu.memory_space<vmem>>, %arg8: memref<16x32xf32, #tpu.memory_space<vmem>>) attributes {dimension_semantics = [#tpu.dimension_semantics<parallel>, #tpu.dimension_semantics<arbitrary>], iteration_bounds = array<i64: 1, 1>, scalar_prefetch = 0 : i64, scratch_operands = 1 : i64, tpu.core_type = #tpu.core_type<tc>, window_params = [{transform_indices = @transform_0, window_bounds = array<i64: 16, 32>}, {transform_indices = @transform_1, window_bounds = array<i64: 32, 128>}, {transform_indices = @transform_2, window_bounds = array<i64: 1, 128>}, {transform_indices = @transform_3, window_bounds = array<i64: 128, 32>}, {pipeline_mode = #tpu.pipeline_mode<synchronous>, transform_indices = @transform_4, window_bounds = array<i64: 1, 32>}, {transform_indices = @transform_5, window_bounds = array<i64: 16, 32>}]} {
    %c0_i32 = arith.constant 0 : i32
    %0 = arith.cmpi eq, %arg1, %c0_i32 : i32
    %1 = arith.extui %0 : i1 to i32
    %c0_i32_0 = arith.constant 0 : i32
    %2 = arith.cmpi ne, %1, %c0_i32_0 : i32
    scf.if %2 {
      %cst_19 = arith.constant 0.000000e+00 : f32
      %32 = vector.broadcast %cst_19 : f32 to vector<16x32xf32>
      %c0_20 = arith.constant 0 : index
      %c0_21 = arith.constant 0 : index
      %33 = vector.load %arg8[%c0_20, %c0_21] : memref<16x32xf32, #tpu.memory_space<vmem>>, vector<16x32xf32>
      tpu.vector_store %arg8[%c0_20, %c0_21], %32 {strides = array<i32>} : memref<16x32xf32, #tpu.memory_space<vmem>>, vector<16x32xf32>,
    } else {
    }
    %c0 = arith.constant 0 : index
    %c0_1 = arith.constant 0 : index
    %3 = vector.load %arg2[%c0, %c0_1] : memref<16x32xbf16, #tpu.memory_space<vmem>>, vector<16x32xbf16>
    %c0_2 = arith.constant 0 : index
    %c0_3 = arith.constant 0 : index
    %4 = vector.load %arg3[%c0_2, %c0_3] : memref<32x128xbf16, #tpu.memory_space<vmem>>, vector<32x128xbf16>
    %cst = arith.constant dense<0.000000e+00> : vector<16x128xf32>
    %5 = tpu.matmul %3, %4, %cst {dimension_numbers = #tpu.dot_dimension_numbers<[1], [0], [0], [1], [0, 0, 1, 1], [], []>} : vector<16x32xbf16>, vector<32x128xbf16>, vector<16x128xf32> -> vector<16x128xf32>
    %c0_4 = arith.constant 0 : index
    %c0_5 = arith.constant 0 : index
    %6 = vector.load %arg4[%c0_4, %c0_5] : memref<1x128xbf16, #tpu.memory_space<vmem>>, vector<1x128xbf16>
    %7 = arith.extf %6 : vector<1x128xbf16> to vector<1x128xf32>
    %8 = vector.broadcast %7 : vector<1x128xf32> to vector<16x128xf32>
    %9 = arith.addf %5, %8 : vector<16x128xf32>
    %cst_6 = arith.constant 5.000000e-01 : f32
    %10 = vector.broadcast %cst_6 : f32 to vector<16x128xf32>
    %11 = arith.mulf %10, %9 : vector<16x128xf32>
    %cst_7 = arith.constant 4.471500e-02 : f32
    %12 = vector.broadcast %cst_7 : f32 to vector<16x128xf32>
    %13 = arith.mulf %12, %9 : vector<16x128xf32>
    %14 = arith.mulf %13, %9 : vector<16x128xf32>
    %15 = arith.mulf %14, %9 : vector<16x128xf32>
    %16 = arith.addf %9, %15 : vector<16x128xf32>
    %cst_8 = arith.constant 0.797884583 : f32
    %17 = vector.broadcast %cst_8 : f32 to vector<16x128xf32>
    %18 = arith.mulf %17, %16 : vector<16x128xf32>
    %19 = math.tanh %18 : vector<16x128xf32>
    %cst_9 = arith.constant 1.000000e+00 : f32
    %20 = vector.broadcast %cst_9 : f32 to vector<16x128xf32>
    %21 = arith.addf %20, %19 : vector<16x128xf32>
    %22 = arith.mulf %11, %21 : vector<16x128xf32>
    %c0_10 = arith.constant 0 : index
    %c0_11 = arith.constant 0 : index
    %23 = vector.load %arg8[%c0_10, %c0_11] : memref<16x32xf32, #tpu.memory_space<vmem>>, vector<16x32xf32>
    %24 = arith.truncf %22 : vector<16x128xf32> to vector<16x128xbf16>
    %c0_12 = arith.constant 0 : index
    %c0_13 = arith.constant 0 : index
    %25 = vector.load %arg5[%c0_12, %c0_13] : memref<128x32xbf16, #tpu.memory_space<vmem>>, vector<128x32xbf16>
    %cst_14 = arith.constant dense<0.000000e+00> : vector<16x32xf32>
    %26 = tpu.matmul %24, %25, %cst_14 {dimension_numbers = #tpu.dot_dimension_numbers<[1], [0], [0], [1], [0, 0, 1, 1], [], []>} : vector<16x128xbf16>, vector<128x32xbf16>, vector<16x32xf32> -> vector<16x32xf32>
    %27 = arith.addf %23, %26 : vector<16x32xf32>
    %c0_15 = arith.constant 0 : index
    %c0_16 = arith.constant 0 : index
    %28 = vector.load %arg8[%c0_15, %c0_16] : memref<16x32xf32, #tpu.memory_space<vmem>>, vector<16x32xf32>
    tpu.vector_store %arg8[%c0_15, %c0_16], %27 {strides = array<i32>} : memref<16x32xf32, #tpu.memory_space<vmem>>, vector<16x32xf32>,
    %c0_i32_17 = arith.constant 0 : i32
    %29 = arith.cmpi eq, %arg1, %c0_i32_17 : i32
    %30 = arith.extui %29 : i1 to i32
    %c0_i32_18 = arith.constant 0 : i32
    %31 = arith.cmpi ne, %30, %c0_i32_18 : i32
    scf.if %31 {
      %c0_19 = arith.constant 0 : index
      %c0_20 = arith.constant 0 : index
      %32 = vector.load %arg8[%c0_19, %c0_20] : memref<16x32xf32, #tpu.memory_space<vmem>>, vector<16x32xf32>
      %c0_21 = arith.constant 0 : index
      %c0_22 = arith.constant 0 : index
      %33 = vector.load %arg6[%c0_21, %c0_22] : memref<1x32xbf16, #tpu.memory_space<vmem>>, vector<1x32xbf16>
      %34 = arith.extf %33 : vector<1x32xbf16> to vector<1x32xf32>
      %35 = vector.broadcast %34 : vector<1x32xf32> to vector<16x32xf32>
      %36 = arith.addf %32, %35 : vector<16x32xf32>
      %37 = arith.truncf %36 : vector<16x32xf32> to vector<16x32xbf16>
      %c0_23 = arith.constant 0 : index
      %c0_24 = arith.constant 0 : index
      %38 = vector.load %arg7[%c0_23, %c0_24] : memref<16x32xbf16, #tpu.memory_space<vmem>>, vector<16x32xbf16>
      tpu.vector_store %arg7[%c0_23, %c0_24], %37 {strides = array<i32>} : memref<16x32xbf16, #tpu.memory_space<vmem>>, vector<16x32xbf16>,
    } else {
    }
    return
  }
  func.func @transform_0(%arg0: i32, %arg1: i32) -> (i32, i32) {
    %c0_i32 = arith.constant 0 : i32
    %c0_i32_0 = arith.constant 0 : i32
    return %arg0, %c0_i32 : i32, i32
  }
  func.func @transform_1(%arg0: i32, %arg1: i32) -> (i32, i32) {
    %c0_i32 = arith.constant 0 : i32
    %c0_i32_0 = arith.constant 0 : i32
    return %c0_i32, %arg1 : i32, i32
  }
  func.func @transform_2(%arg0: i32, %arg1: i32) -> (i32, i32) {
    %c0_i32 = arith.constant 0 : i32
    %c0_i32_0 = arith.constant 0 : i32
    return %c0_i32, %arg1 : i32, i32
  }
  func.func @transform_3(%arg0: i32, %arg1: i32) -> (i32, i32) {
    %c0_i32 = arith.constant 0 : i32
    %c0_i32_0 = arith.constant 0 : i32
    return %arg1, %c0_i32 : i32, i32
  }
  func.func @transform_4(%arg0: i32, %arg1: i32) -> (i32, i32) {
    %c0_i32 = arith.constant 0 : i32
    %c0_i32_0 = arith.constant 0 : i32
    %c0_i32_1 = arith.constant 0 : i32
    return %c0_i32, %c0_i32_0 : i32, i32
  }
  func.func @transform_5(%arg0: i32, %arg1: i32) -> (i32, i32) {
    %c0_i32 = arith.constant 0 : i32
    %c0_i32_0 = arith.constant 0 : i32
    return %arg0, %c0_i32 : i32, i32
  }
}

</mosaic_0001>

<llo_original>
// kernel: tpu_custom_call.1
$region0: #{tpu_custom_call.1}
  #allocation0 [shape = 'u32[]', space=smem, size = 0x4, offset = 0x4, fixed_abs, tag = 'smem constant byte address 0x4 - core index']
  #allocation1 [shape = 'u32[144,128]{1,0:T(1,128)}', space=vmem, size = 0x12000, scoped, tag = 'internal scratch']
  #allocation2 [shape = 'f32[16,32]{1,0:T(8,128)}', space=vmem, size = 0x2000, scoped, tag = 'scratch operand']
  %s0 = inlined_call_operand.vmem [shape: bf16[16,32], index: 0, kind: input, shape index: {}]
  %s1 = inlined_call_operand.vmem [shape: bf16[32,128], index: 1, kind: input, shape index: {}]
  %s2 = inlined_call_operand.vmem [shape: bf16[1,128], index: 2, kind: input, shape index: {}]
  %s3 = inlined_call_operand.vmem [shape: bf16[128,32], index: 3, kind: input, shape index: {}]
  %s4 = inlined_call_operand.vmem [shape: bf16[1,32], index: 4, kind: input, shape index: {}]
  %s5 = inlined_call_operand.hbm [shape: bf16[16,32], index: 5, kind: output, shape index: {}]
  %s6 = sld [smem:[#allocation0]]
  $region38: #{tpu_custom_call.1} parent=0
    _
  %s8 = ssub.s32 1, %s6
  %s9 = scalar_select 0, %s8, %s6
  $region1: #{tpu_custom_call.1} parent=0
    #allocation3 [shape = 'u8[4096]{0}', space=vmem, size = 0x1000, scoped, tag = 'output window, operand 0, single buffered']
    #allocation4 [shape = 's32[1]{0}', space=sflag, size = 0x4, scoped, tag = 'scoped memory for tpu_custom_call.1']
    %10 = vsyncpa [#allocation4], 0
    // Predicated region
    $region2: #{tpu_custom_call.1} parent=1 // pred_check
      _
    $region3: #{tpu_custom_call.1} parent=1 // pred_check_branch
      %12 = sbr.rel (0) target = $region5
    $region4: #{tpu_custom_call.1} parent=1 // pred_region
      _
    $region5: #{tpu_custom_call.1} parent=1 // pred_fallthru
      _
    // Predicated region
    $region6: #{tpu_custom_call.1} parent=1 // pred_check
      _
    $region7: #{tpu_custom_call.1} parent=1 // pred_check_branch
      %14 = sbr.rel (0) target = $region9
    $region8: #{tpu_custom_call.1} parent=1 // pred_region
      _
    $region9: #{tpu_custom_call.1} parent=1 // pred_fallthru
      _
    // Predicated region
    $region10: #{tpu_custom_call.1} parent=1 // pred_check
      _
    $region11: #{tpu_custom_call.1} parent=1 // pred_check_branch
      %16 = sbr.rel (0) target = $region13
    $region12: #{tpu_custom_call.1} parent=1 // pred_region
      _
    $region13: #{tpu_custom_call.1} parent=1 // pred_fallthru
      _
    // Predicated region
    $region14: #{tpu_custom_call.1} parent=1 // pred_check
      _
    $region15: #{tpu_custom_call.1} parent=1 // pred_check_branch
      %18 = sbr.rel (0) target = $region17
    $region16: #{tpu_custom_call.1} parent=1 // pred_region
      _
    $region17: #{tpu_custom_call.1} parent=1 // pred_fallthru
      _
    // Predicated region
    $region18: #{tpu_custom_call.1} parent=1 // pred_check
      _
    $region19: #{tpu_custom_call.1} parent=1 // pred_check_branch
      %20 = sbr.rel (0) target = $region21
    $region20: #{tpu_custom_call.1} parent=1 // pred_region
      _
    $region21: #{tpu_custom_call.1} parent=1 // pred_fallthru
      _
    %p22 = scmp.eq.s32.totalorder 0, 0
    // Predicated region
    $region22: #{tpu_custom_call.1} parent=1 // pred_check
      %p23 = pneg %p22
    $region23: #{tpu_custom_call.1} parent=1 // pred_check_branch
      %25 = sbr.rel (%p23) target = $region25
    $region24: #{tpu_custom_call.1} parent=1 // pred_region
      %vm26 = vcmask 261120
      %27 = vst.msk [vmem:[#allocation2] sm:$0xff] %vm26, 0.0
      %28 = vst.msk [vmem:[#allocation2 + $0x8] sm:$0xff] %vm26, 0.0
    $region25: #{tpu_custom_call.1} parent=1 // pred_fallthru
      _
    %v29 = vld [vmem:[%s0] sm:$0xf]
    %v30 = vld [vmem:[%s0 + $0x4] sm:$0xf]
    %v31 = vld [vmem:[%s1] sm:$0xf]
    %v32 = vld [vmem:[%s1 + $0x4] sm:$0xf]
    %v33 = vld [vmem:[%s1 + $0x8] sm:$0xf]
    %v34 = vld [vmem:[%s1 + $0xc] sm:$0xf]
    %v35 = vld [vmem:[%s2] sm:$0x1]
    %v36 = vunpack.c.l.bf16 %v35
    %v37 = vlaneseq
    %v38 = vshrl.u32 %v37, 7
    %v39 = vsub.s32 0, %v38
    %v40 = vrot.slane %v36, %v39
    %v43 = vunpack.c.l.b16 %v29
    %v44 = vunpack.c.l.b16 %v30
    %v45 = vpack.c.b16 %v44, %v43
    %v50 = vunpack.c.l.b16 %v31
    %v51 = vunpack.c.l.b16 %v32
    %v52 = vunpack.c.l.b16 %v33
    %v53 = vunpack.c.l.b16 %v34
    %v54 = vpack.c.b16 %v51, %v50
    %v55 = vpack.c.b16 %v53, %v52
    %vm58 = vcmask 261120
    %v60 = vsel %vm58, %v45, 0
    %62 = vmatprep.subr.bf16.mxu0 0
    %63 = vmatpush1.bf16.msra.mxu0 0
    %64 = vmatprep.subr.bf16.mxu0 0
    %65 = vmatpush1.bf16.msra.mxu0 0
    %66 = vmatprep.subr.bf16.mxu0 0
    %67 = vmatpush1.bf16.msra.mxu0 0
    %68 = vmatprep.subr.bf16.mxu0 0
    %69 = vmatpush1.bf16.msra.mxu0 0
    %70 = vmatprep.subr.bf16.mxu0 0
    %71 = vmatpush1.bf16.msra.mxu0 0
    %72 = vmatprep.subr.bf16.mxu0 0
    %73 = vmatpush1.bf16.msra.mxu0 0
    %74 = vmatprep.subr.bf16.mxu0 0
    %75 = vmatpush1.bf16.msra.mxu0 %v55
    %76 = vmatprep.subr.bf16.mxu0 0
    %77 = vmatpush1.bf16.msra.mxu0 %v54
    %78 = vmatprep.subr.bf16.mxu0 0
    %79 = vmatpush2.bf16.msra.mxu0 0
    %80 = vmatprep.subr.bf16.mxu0 0
    %81 = vmatpush2.bf16.msra.mxu0 0
    %82 = vmatprep.subr.bf16.mxu0 0
    %83 = vmatpush2.bf16.msra.mxu0 0
    %84 = vmatprep.subr.bf16.mxu0 0
    %85 = vmatpush2.bf16.msra.mxu0 0
    %86 = vmatprep.subr.bf16.mxu0 0
    %87 = vmatpush2.bf16.msra.mxu0 0
    %88 = vmatprep.subr.bf16.mxu0 0
    %89 = vmatpush2.bf16.msra.mxu0 0
    %90 = vmatprep.subr.bf16.mxu0 0
    %91 = vmatpush2.bf16.msra.mxu0 0
    %92 = vmatprep.subr.bf16.mxu0 0
    %93 = vmatpush2.bf16.msra.mxu0 0
    %94 = vmatprep.mubr.bf16.mxu0 0
    %95 = vmatmul.mubr.bf16.gmra.mxu0 %v60
    %v96 = vpop.f32.mrf.mxu0
    %v97 = vadd.f32 %v40, %v96
    %v98 = vpop.f32.mrf.mxu0
    %v99 = vpop.f32.mrf.mxu0
    %v100 = vadd.f32 %v40, %v99
    %v101 = vpop.f32.mrf.mxu0
    %102 = vdwg.mxu0
    %v103 = vmul.f32 %v97, 0.5
    %v104 = vmul.f32 %v100, 0.5
    %v105 = vmul.f32 %v97, 0.044715
    %v106 = vmul.f32 %v100, 0.044715
    %v107 = vmul.f32 %v105, %v97
    %v108 = vmul.f32 %v106, %v100
    %v109 = vmul.f32 %v107, %v97
    %v110 = vmul.f32 %v108, %v100
    %v111 = vadd.f32 %v97, %v109
    %v112 = vadd.f32 %v100, %v110
    %v113 = vmul.f32 %v111, 0.7978846
    %v114 = vmul.f32 %v112, 0.7978846
    %v115 = vtanh.pop %v113
    %v116 = vtanh.pop %v114
    %v117 = vadd.f32 %v115, 1.0
    %v118 = vadd.f32 %v116, 1.0
    %v119 = vmul.f32 %v103, %v117
    %v120 = vmul.f32 %v104, %v118
    %v121 = vld [vmem:[#allocation2] sm:$0xff]
    %v122 = vld [vmem:[#allocation2 + $0x8] sm:$0xff]
    %v123 = vpack.c.bf16 %v120, %v119
    %v124 = vld [vmem:[%s3] sm:$0xf]
    %v125 = vld [vmem:[%s3 + $0x4] sm:$0xf]
    %v126 = vld [vmem:[%s3 + $0x8] sm:$0xf]
    %v127 = vld [vmem:[%s3 + $0xc] sm:$0xf]
    %v128 = vld [vmem:[%s3 + $0x10] sm:$0xf]
    %v129 = vld [vmem:[%s3 + $0x14] sm:$0xf]
    %v130 = vld [vmem:[%s3 + $0x18] sm:$0xf]
    %v131 = vld [vmem:[%s3 + $0x1c] sm:$0xf]
    %v132 = vld [vmem:[%s3 + $0x20] sm:$0xf]
    %v133 = vld [vmem:[%s3 + $0x24] sm:$0xf]
    %v134 = vld [vmem:[%s3 + $0x28] sm:$0xf]
    %v135 = vld [vmem:[%s3 + $0x2c] sm:$0xf]
    %v136 = vld [vmem:[%s3 + $0x30] sm:$0xf]
    %v137 = vld [vmem:[%s3 + $0x34] sm:$0xf]
    %v138 = vld [vmem:[%s3 + $0x38] sm:$0xf]
    %v139 = vld [vmem:[%s3 + $0x3c] sm:$0xf]
    %v156 = vunpack.c.l.b16 %v124
    %v157 = vunpack.c.l.b16 %v125
    %v158 = vunpack.c.l.b16 %v126
    %v159 = vunpack.c.l.b16 %v127
    %v160 = vunpack.c.l.b16 %v128
    %v161 = vunpack.c.l.b16 %v129
    %v162 = vunpack.c.l.b16 %v130
    %v163 = vunpack.c.l.b16 %v131
    %v164 = vunpack.c.l.b16 %v132
    %v165 = vunpack.c.l.b16 %v133
    %v166 = vunpack.c.l.b16 %v134
    %v167 = vunpack.c.l.b16 %v135
    %v168 = vunpack.c.l.b16 %v136
    %v169 = vunpack.c.l.b16 %v137
    %v170 = vunpack.c.l.b16 %v138
    %v171 = vunpack.c.l.b16 %v139
    %v172 = vpack.c.b16 %v157, %v156
    %v173 = vpack.c.b16 %v159, %v158
    %v174 = vpack.c.b16 %v161, %v160
    %v175 = vpack.c.b16 %v163, %v162
    %v176 = vpack.c.b16 %v165, %v164
    %v177 = vpack.c.b16 %v167, %v166
    %v178 = vpack.c.b16 %v169, %v168
    %v179 = vpack.c.b16 %v171, %v170
    %188 = vmatprep.subr.bf16.mxu0 0
    %189 = vmatpush1.bf16.msra.mxu0 %v179
    %190 = vmatprep.subr.bf16.mxu0 0
    %191 = vmatpush1.bf16.msra.mxu0 %v178
    %192 = vmatprep.subr.bf16.mxu0 0
    %193 = vmatpush1.bf16.msra.mxu0 %v177
    %194 = vmatprep.subr.bf16.mxu0 0
    %195 = vmatpush1.bf16.msra.mxu0 %v176
    %196 = vmatprep.subr.bf16.mxu0 0
    %197 = vmatpush1.bf16.msra.mxu0 %v175
    %198 = vmatprep.subr.bf16.mxu0 0
    %199 = vmatpush1.bf16.msra.mxu0 %v174
    %200 = vmatprep.subr.bf16.mxu0 0
    %201 = vmatpush1.bf16.msra.mxu0 %v173
    %202 = vmatprep.subr.bf16.mxu0 0
    %203 = vmatpush1.bf16.msra.mxu0 %v172
    %204 = vmatprep.subr.bf16.mxu0 0
    %205 = vmatpush2.bf16.msra.mxu0 0
    %206 = vmatprep.subr.bf16.mxu0 0
    %207 = vmatpush2.bf16.msra.mxu0 0
    %208 = vmatprep.subr.bf16.mxu0 0
    %209 = vmatpush2.bf16.msra.mxu0 0
    %210 = vmatprep.subr.bf16.mxu0 0
    %211 = vmatpush2.bf16.msra.mxu0 0
    %212 = vmatprep.subr.bf16.mxu0 0
    %213 = vmatpush2.bf16.msra.mxu0 0
    %214 = vmatprep.subr.bf16.mxu0 0
    %215 = vmatpush2.bf16.msra.mxu0 0
    %216 = vmatprep.subr.bf16.mxu0 0
    %217 = vmatpush2.bf16.msra.mxu0 0
    %218 = vmatprep.subr.bf16.mxu0 0
    %219 = vmatpush2.bf16.msra.mxu0 0
    %220 = vmatprep.mubr.bf16.mxu0 0
    %221 = vmatmul.mubr.bf16.gmra.mxu0 %v123
    %v222 = vpop.f32.mrf.mxu0
    %v223 = vadd.f32 0.0, %v222
    %v224 = vpop.f32.mrf.mxu0
    %v225 = vpop.f32.mrf.mxu0
    %v226 = vadd.f32 0.0, %v225
    %v227 = vpop.f32.mrf.mxu0
    %228 = vdwg.mxu0
    %v229 = vadd.f32 %v121, %v223
    %v230 = vadd.f32 %v122, %v226
    %231 = vst.msk [vmem:[#allocation2] sm:$0xff] %vm58, %v229
    %232 = vst.msk [vmem:[#allocation2 + $0x8] sm:$0xff] %vm58, %v230
    // Predicated region
    $region26: #{tpu_custom_call.1} parent=1 // pred_check
      %p233 = pneg %p22
    $region27: #{tpu_custom_call.1} parent=1 // pred_check_branch
      %235 = sbr.rel (%p233) target = $region29
    $region28: #{tpu_custom_call.1} parent=1 // pred_region
      %v236 = vld [vmem:[#allocation2] sm:$0xff]
      %v237 = vld [vmem:[#allocation2 + $0x8] sm:$0xff]
      %v238 = vld [vmem:[%s4] sm:$0x1]
      %v239 = vunpack.c.l.bf16 %v238
      %v240 = vlaneseq
      %v241 = vshrl.u32 %v240, 7
      %v242 = vsub.s32 0, %v241
      %v243 = vrot.slane %v239, %v242
      %v244 = vadd.f32 %v236, %v243
      %v245 = vadd.f32 %v237, %v243
      %v246 = vpack.c.bf16 %v245, %v244
      %v248 = vunpack.c.l.b16 %v246
      %v249 = vunpack.c.h.b16 %v246
      %v250 = vpack.c.b16 %v248, %v248
      %v251 = vpack.c.b16 %v249, %v249
      %vm254 = vcmask 257024
      %255 = vst.msk [vmem:[#allocation3] sm:$0xf] %vm254, %v250
      %256 = vst.msk [vmem:[#allocation3 + $0x4] sm:$0xf] %vm254, %v251
    $region29: #{tpu_custom_call.1} parent=1 // pred_fallthru
      _
    // Predicated region
    $region30: #{tpu_custom_call.1} parent=1 // pred_check
      _
    $region31: #{tpu_custom_call.1} parent=1 // pred_check_branch
      %258 = sbr.rel (0) target = $region33
    $region32: #{tpu_custom_call.1} parent=1 // pred_region
      %s260 = ssub.s32 128, 128
      %261 = vsyncadd [#allocation4], %s260
      %s262 = sshll.u32 [#allocation3], 4
      %s263 = int_to_ptr.vmem [resolvable:$true] %s262
      %268 = dma.vmem_to_hbm [thread:$0]  %s263, 128, %s5, [#allocation4], 64, 64, 4
    $region33: #{tpu_custom_call.1} parent=1 // pred_fallthru
      _
    // Predicated region
    $region34: #{tpu_custom_call.1} parent=1 // pred_check
      _
    $region35: #{tpu_custom_call.1} parent=1 // pred_check_branch
      %270 = sbr.rel (0) target = $region37
    $region36: #{tpu_custom_call.1} parent=1 // pred_region
      %271 = dma.done [#allocation4], 128
    $region37: #{tpu_custom_call.1} parent=1 // pred_fallthru
      _
    %272 = vsyncpa [#allocation4], 1

</llo_original>
